<compile_context>
chip_gen: v7x
topology: tpu7x:2x2x1
jax: 0.10.0
libtpu: 0.0.40
codegen_flags: <defaults>
</compile_context>

<pallas_src>
import jax
import jax.numpy as jnp
from jax import lax
from jax.experimental import pallas as pl
from jax.experimental.pallas import tpu as pltpu


def _vmem_budget_bytes():
    """Best-effort per-core VMEM capacity; conservative 64 MiB (v7x) fallback."""
    try:
        info = pltpu.get_tpu_info()
        cap = getattr(info, "vmem_capacity_bytes", None)
        if cap:
            return int(cap)
    except Exception:
        pass
    return 64 * 1024 * 1024


def _tikhonov_kernel(a_ref, b_ref, xc_ref, xr_ref, reg_ref, xp_ref, out_ref):
    """One M-tile of the data term; tile 0 additionally adds the reg term."""
    i = pl.program_id(0)

    # Data-term partial: || A_tile @ x - b_tile ||^2.
    # MXU matvec with f32 accumulate; the kernel is HBM-bandwidth bound, the
    # matmul hides under the A-tile DMA.
    r = jnp.dot(a_ref[...], xc_ref[...],
                preferred_element_type=jnp.float32) - b_ref[...]     # (TILE_M, 1)
    partial = jnp.sum(r * r)

    # Each grid step owns one lane-dense 128-wide output block; the partial sum
    # sits in lane 0, remaining lanes are zero, so the wrapper can just jnp.sum.
    lane = lax.broadcasted_iota(jnp.int32, (1, 128), 1)
    out_ref[...] = jnp.where(lane == 0, partial, jnp.float32(0.0))

    # Regularization term sum((x - xp) * reg * (x - xp)) is independent of the
    # M tiling: hoisted out of the per-tile loop, computed exactly once (tile 0)
    # from lane-dense (1, N) row vectors.
    @pl.when(i == 0)
    def _():
        d = xr_ref[...] - xp_ref[...]
        reg_term = jnp.sum(d * reg_ref[...] * d)
        out_ref[...] = jnp.where(lane == 0, partial + reg_term, jnp.float32(0.0))


def tikhonov_loss(A, x, b, reg_vec, x_prior, *, tile_m=None):
    """Scalar Tikhonov loss. A:(M,N); x, reg_vec, x_prior:(N,1)-like; b:(M,1)-like."""
    A = jnp.asarray(A, jnp.float32)
    M, N = A.shape
    x_col = jnp.asarray(x, jnp.float32).reshape(N, 1)          # MXU RHS
    b_col = jnp.asarray(b, jnp.float32).reshape(M, 1)
    x_row = x_col.reshape(1, N)                                # lane-dense copies
    reg_row = jnp.asarray(reg_vec, jnp.float32).reshape(1, N)
    xp_row = jnp.asarray(x_prior, jnp.float32).reshape(1, N)

    # --- tile the M (row) axis so A streams HBM->VMEM double-buffered ---------
    vmem_budget = _vmem_budget_bytes()
    if tile_m is None:
        # Biggest tile that double-buffers comfortably: ~1/8 of per-core VMEM per
        # A tile, capped at 8 MiB (measured large-tile sweet spot).  This halves
        # automatically on v7x (64 MiB/core) vs v5e/v6e (128 MiB).
        a_tile_budget = max(512 * 1024, min(8 * 1024 * 1024, vmem_budget // 8))
        tile_m = max(1, a_tile_budget // (N * 4))
    tile_m = int(min(int(tile_m), max(M, 1)))
    tile_m = -(-tile_m // 8) * 8                               # sublane-align (x8)

    g = pl.cdiv(M, tile_m)
    m_pad = g * tile_m
    if m_pad != M:
        # Zero rows of A and b contribute (0 - 0)^2 = 0 to the loss: exact padding.
        A = jnp.pad(A, ((0, m_pad - M), (0, 0)))
        b_col = jnp.pad(b_col, ((0, m_pad - M), (0, 0)))

    # NOTE: for very large N (>~8K) a second ("arbitrary") grid axis over the
    # contraction dim with a (tile_m, 1) VMEM accumulator would bound the tile in
    # both dims; not needed at these sizes.

    vmem_limit = 2 * tile_m * N * 4 + (8 << 20)                # dbl-buffered A + headroom
    vmem_limit = int(min(max(vmem_limit, 16 << 20), vmem_budget))

    cost = pl.CostEstimate(
        flops=2 * m_pad * N + 3 * m_pad + 4 * N,
        transcendentals=0,
        bytes_accessed=4 * (m_pad * N + m_pad + 4 * N + g * 128),
    )

    partials = pl.pallas_call(
        _tikhonov_kernel,
        out_shape=jax.ShapeDtypeStruct((1, g * 128), jnp.float32),
        grid_spec=pltpu.PrefetchScalarGridSpec(
            num_scalar_prefetch=0,
            grid=(g,),
            in_specs=[
                pl.BlockSpec((tile_m, N), lambda i: (i, 0)),   # A       (streamed)
                pl.BlockSpec((tile_m, 1), lambda i: (i, 0)),   # b       (streamed)
                pl.BlockSpec((N, 1), lambda i: (0, 0)),        # x col   (MXU RHS, resident)
                pl.BlockSpec((1, N), lambda i: (0, 0)),        # x row   (lane-dense)
                pl.BlockSpec((1, N), lambda i: (0, 0)),        # reg row (lane-dense)
                pl.BlockSpec((1, N), lambda i: (0, 0)),        # xp row  (lane-dense)
            ],
            out_specs=pl.BlockSpec((1, 128), lambda i: (0, i)),
        ),
        compiler_params=pltpu.CompilerParams(
            dimension_semantics=("parallel",),   # row tiles independent -> v7x megacore
            vmem_limit_bytes=vmem_limit,
        ),
        cost_estimate=cost,
    )(A, b_col, x_col, x_row, reg_row, xp_row)

    # Tiny final reduction over per-tile partial sums (one non-zero lane per
    # 128-wide block), done in plain JAX: negligible next to streaming A once.
    return jnp.sum(partials)


if __name__ == "__main__":
    key = jax.random.PRNGKey(0)
    kA, kx, kb, kr, kp = jax.random.split(key, 5)

    # Small shapes; M intentionally not a multiple of the tile to exercise padding.
    M, N = 500, 256
    A = jax.random.normal(kA, (M, N), dtype=jnp.float32)
    x = jax.random.normal(kx, (N, 1), dtype=jnp.float32)
    b = jax.random.normal(kb, (M, 1), dtype=jnp.float32)
    reg_vec = jax.random.uniform(kr, (N, 1), dtype=jnp.float32)   # lamb^2 per entry
    x_prior = jax.random.normal(kp, (N, 1), dtype=jnp.float32)

    # Pure-JAX reference (== torch.square(norm(A@x - b)) + sum((x-xp)*reg*(x-xp)))
    ref = jnp.sum((A @ x - b) ** 2) + jnp.sum((x - x_prior) * reg_vec * (x - x_prior))

    # Multi-tile grid (tile_m=128 -> 4 grid steps): exercises streaming + padding.
    loss = jax.block_until_ready(tikhonov_loss(A, x, b, reg_vec, x_prior, tile_m=128))
    assert jnp.allclose(loss, ref, rtol=1e-3, atol=1e-3), (loss, ref)

    # Auto tile-size path (tile derived from per-core VMEM capacity).
    loss2 = jax.block_until_ready(tikhonov_loss(A, x, b, reg_vec, x_prior))
    assert jnp.allclose(loss2, ref, rtol=1e-3, atol=1e-3), (loss2, ref)

    print("KERNEL_OK")
</pallas_src>

<mosaic_0001>
module attributes {stable_mosaic.version = 11 : i64} {
  func.func @_tikhonov_kernel(%arg0: i32, %arg1: memref<128x256xf32, #tpu.memory_space<vmem>>, %arg2: memref<128x1xf32, #tpu.memory_space<vmem>>, %arg3: memref<256x1xf32, #tpu.memory_space<vmem>>, %arg4: memref<1x256xf32, #tpu.memory_space<vmem>>, %arg5: memref<1x256xf32, #tpu.memory_space<vmem>>, %arg6: memref<1x256xf32, #tpu.memory_space<vmem>>, %arg7: memref<1x128xf32, #tpu.memory_space<vmem>>) attributes {dimension_semantics = [#tpu.dimension_semantics<parallel>], iteration_bounds = array<i64: 4>, scalar_prefetch = 0 : i64, scratch_operands = 0 : i64, tpu.core_type = #tpu.core_type<tc>, window_params = [{transform_indices = @transform_0, window_bounds = array<i64: 128, 256>}, {transform_indices = @transform_1, window_bounds = array<i64: 128, 1>}, {pipeline_mode = #tpu.pipeline_mode<synchronous>, transform_indices = @transform_2, window_bounds = array<i64: 256, 1>}, {pipeline_mode = #tpu.pipeline_mode<synchronous>, transform_indices = @transform_3, window_bounds = array<i64: 1, 256>}, {pipeline_mode = #tpu.pipeline_mode<synchronous>, transform_indices = @transform_4, window_bounds = array<i64: 1, 256>}, {pipeline_mode = #tpu.pipeline_mode<synchronous>, transform_indices = @transform_5, window_bounds = array<i64: 1, 256>}, {transform_indices = @transform_6, window_bounds = array<i64: 1, 128>}]} {
    %c0 = arith.constant 0 : index
    %c0_0 = arith.constant 0 : index
    %0 = vector.load %arg1[%c0, %c0_0] : memref<128x256xf32, #tpu.memory_space<vmem>>, vector<128x256xf32>
    %c0_1 = arith.constant 0 : index
    %c0_2 = arith.constant 0 : index
    %1 = vector.load %arg3[%c0_1, %c0_2] : memref<256x1xf32, #tpu.memory_space<vmem>>, vector<256x1xf32>
    %cst = arith.constant dense<0.000000e+00> : vector<128x1xf32>
    %2 = tpu.matmul %0, %1, %cst {dimension_numbers = #tpu.dot_dimension_numbers<[1], [0], [0], [1], [0, 0, 1, 1], [], []>} : vector<128x256xf32>, vector<256x1xf32>, vector<128x1xf32> -> vector<128x1xf32>
    %c0_3 = arith.constant 0 : index
    %c0_4 = arith.constant 0 : index
    %3 = vector.load %arg2[%c0_3, %c0_4] : memref<128x1xf32, #tpu.memory_space<vmem>>, vector<128x1xf32>
    %4 = arith.subf %2, %3 : vector<128x1xf32>
    %5 = arith.mulf %4, %4 : vector<128x1xf32>
    %6 = vector.shape_cast %5 : vector<128x1xf32> to vector<1x128x1xf32>
    %cst_5 = arith.constant dense<0.000000e+00> : vector<1xf32>
    %7 = vector.multi_reduction <add>, %6, %cst_5 [1, 2] : vector<1x128x1xf32> to vector<1xf32>
    %8 = vector.shape_cast %7 : vector<1xf32> to vector<1x1x1xf32>
    %9 = vector.extract %8[0, 0, 0] : f32 from vector<1x1x1xf32>
    %10 = tpu.iota {dimensions = array<i32: 1>} : vector<1x128xi32>
    %c0_i32 = arith.constant 0 : i32
    %11 = vector.broadcast %c0_i32 : i32 to vector<1x128xi32>
    %12 = arith.cmpi eq, %10, %11 : vector<1x128xi32>
    %cst_6 = arith.constant 0.000000e+00 : f32
    %13 = vector.broadcast %9 : f32 to vector<1x128xf32>
    %14 = vector.broadcast %cst_6 : f32 to vector<1x128xf32>
    %15 = arith.select %12, %13, %14 : vector<1x128xi1>, vector<1x128xf32>
    %c0_7 = arith.constant 0 : index
    %c0_8 = arith.constant 0 : index
    %16 = vector.load %arg7[%c0_7, %c0_8] : memref<1x128xf32, #tpu.memory_space<vmem>>, vector<1x128xf32>
    tpu.vector_store %arg7[%c0_7, %c0_8], %15 {strides = array<i32>} : memref<1x128xf32, #tpu.memory_space<vmem>>, vector<1x128xf32>,
    %c0_i32_9 = arith.constant 0 : i32
    %17 = arith.cmpi eq, %arg0, %c0_i32_9 : i32
    %18 = arith.extui %17 : i1 to i32
    %c0_i32_10 = arith.constant 0 : i32
    %19 = arith.cmpi ne, %18, %c0_i32_10 : i32
    scf.if %19 {
      %c0_11 = arith.constant 0 : index
      %c0_12 = arith.constant 0 : index
      %20 = vector.load %arg4[%c0_11, %c0_12] : memref<1x256xf32, #tpu.memory_space<vmem>>, vector<1x256xf32>
      %c0_13 = arith.constant 0 : index
      %c0_14 = arith.constant 0 : index
      %21 = vector.load %arg6[%c0_13, %c0_14] : memref<1x256xf32, #tpu.memory_space<vmem>>, vector<1x256xf32>
      %22 = arith.subf %20, %21 : vector<1x256xf32>
      %c0_15 = arith.constant 0 : index
      %c0_16 = arith.constant 0 : index
      %23 = vector.load %arg5[%c0_15, %c0_16] : memref<1x256xf32, #tpu.memory_space<vmem>>, vector<1x256xf32>
      %24 = arith.mulf %22, %23 : vector<1x256xf32>
      %25 = arith.mulf %24, %22 : vector<1x256xf32>
      %26 = vector.shape_cast %25 : vector<1x256xf32> to vector<1x1x256xf32>
      %cst_17 = arith.constant dense<0.000000e+00> : vector<1xf32>
      %27 = vector.multi_reduction <add>, %26, %cst_17 [1, 2] : vector<1x1x256xf32> to vector<1xf32>
      %28 = vector.shape_cast %27 : vector<1xf32> to vector<1x1x1xf32>
      %29 = vector.extract %28[0, 0, 0] : f32 from vector<1x1x1xf32>
      %c0_i32_18 = arith.constant 0 : i32
      %30 = vector.broadcast %c0_i32_18 : i32 to vector<1x128xi32>
      %31 = arith.cmpi eq, %10, %30 : vector<1x128xi32>
      %32 = arith.addf %9, %29 : f32
      %cst_19 = arith.constant 0.000000e+00 : f32
      %33 = vector.broadcast %32 : f32 to vector<1x128xf32>
      %34 = vector.broadcast %cst_19 : f32 to vector<1x128xf32>
      %35 = arith.select %31, %33, %34 : vector<1x128xi1>, vector<1x128xf32>
      %c0_20 = arith.constant 0 : index
      %c0_21 = arith.constant 0 : index
      %36 = vector.load %arg7[%c0_20, %c0_21] : memref<1x128xf32, #tpu.memory_space<vmem>>, vector<1x128xf32>
      tpu.vector_store %arg7[%c0_20, %c0_21], %35 {strides = array<i32>} : memref<1x128xf32, #tpu.memory_space<vmem>>, vector<1x128xf32>,
    } else {
    }
    return
  }
  func.func @transform_0(%arg0: i32) -> (i32, i32) {
    %c0_i32 = arith.constant 0 : i32
    %c0_i32_0 = arith.constant 0 : i32
    return %arg0, %c0_i32 : i32, i32
  }
  func.func @transform_1(%arg0: i32) -> (i32, i32) {
    %c0_i32 = arith.constant 0 : i32
    %c0_i32_0 = arith.constant 0 : i32
    return %arg0, %c0_i32 : i32, i32
  }
  func.func @transform_2(%arg0: i32) -> (i32, i32) {
    %c0_i32 = arith.constant 0 : i32
    %c0_i32_0 = arith.constant 0 : i32
    %c0_i32_1 = arith.constant 0 : i32
    return %c0_i32, %c0_i32_0 : i32, i32
  }
  func.func @transform_3(%arg0: i32) -> (i32, i32) {
    %c0_i32 = arith.constant 0 : i32
    %c0_i32_0 = arith.constant 0 : i32
    %c0_i32_1 = arith.constant 0 : i32
    return %c0_i32, %c0_i32_0 : i32, i32
  }
  func.func @transform_4(%arg0: i32) -> (i32, i32) {
    %c0_i32 = arith.constant 0 : i32
    %c0_i32_0 = arith.constant 0 : i32
    %c0_i32_1 = arith.constant 0 : i32
    return %c0_i32, %c0_i32_0 : i32, i32
  }
  func.func @transform_5(%arg0: i32) -> (i32, i32) {
    %c0_i32 = arith.constant 0 : i32
    %c0_i32_0 = arith.constant 0 : i32
    %c0_i32_1 = arith.constant 0 : i32
    return %c0_i32, %c0_i32_0 : i32, i32
  }
  func.func @transform_6(%arg0: i32) -> (i32, i32) {
    %c0_i32 = arith.constant 0 : i32
    %c0_i32_0 = arith.constant 0 : i32
    return %c0_i32, %arg0 : i32, i32
  }
}

</mosaic_0001>

<llo_original>
// kernel: tpu_custom_call.1
$region0: #{tpu_custom_call.1}
  #allocation0 [shape = 'u32[]', space=smem, size = 0x4, offset = 0x4, fixed_abs, tag = 'smem constant byte address 0x4 - core index']
  #allocation1 [shape = 'u32[144,128]{1,0:T(1,128)}', space=vmem, size = 0x12000, scoped, tag = 'internal scratch']
  %s0 = inlined_call_operand.hbm [shape: f32[512,256], index: 0, kind: input, shape index: {}]
  %s1 = inlined_call_operand.vmem [shape: f32[512,1], index: 1, kind: input, shape index: {}]
  %s2 = inlined_call_operand.vmem [shape: f32[256,1], index: 2, kind: input, shape index: {}]
  %s3 = inlined_call_operand.vmem [shape: f32[1,256], index: 3, kind: input, shape index: {}]
  %s4 = inlined_call_operand.vmem [shape: f32[1,256], index: 4, kind: input, shape index: {}]
  %s5 = inlined_call_operand.vmem [shape: f32[1,256], index: 5, kind: input, shape index: {}]
  %s6 = inlined_call_operand.hbm [shape: f32[1,512], index: 6, kind: output, shape index: {}]
  %s7 = sld [smem:[#allocation0]]
  $region65: #{tpu_custom_call.1} parent=0
    _
  %s9 = ssub.s32 1, %s7
  %s10 = scalar_select 0, %s9, %s7
  $region1: #{tpu_custom_call.1} parent=0
    #allocation2 [shape = 'u8[262144]{0}', space=vmem, size = 0x40000, scoped, tag = 'input window, operand 0']
    #allocation3 [shape = 's32[2]{0}', space=sflag, size = 0x8, scoped, tag = 'scoped memory for tpu_custom_call.1']
    #allocation4 [shape = 's32[2]{0}', space=sflag, size = 0x8, scoped, tag = 'scoped memory for tpu_custom_call.1']
    #allocation5 [shape = 'u8[1024]{0}', space=vmem, size = 0x400, scoped, tag = 'output window, operand 0']
    %11 = vsyncpa [#allocation3], 0
    %s12 = scalar_lea.sflag [#allocation3], 1
    %13 = vsyncpa %s12, 0
    %14 = vsyncpa [#allocation4], 0
    %s15 = scalar_lea.sflag [#allocation4], 1
    %16 = vsyncpa %s15, 0
    loop: start=0, step=1, limit=6
    $region2: #{tpu_custom_call.1} parent=1 // loop_pre_header
      _
    $region3: #{tpu_custom_call.1} parent=1 // loop_header
      %s18 = sphi 0, %s22
      %p19 = scmp.ge.s32.totalorder %s18, 6
      %s28 = sphi 0, %s30
      %s31 = sphi 0, %s28
      %s32 = sphi 0, %s31
      %s48 = sphi 0, %s32
      %s54 = sphi 0, %s56
      %s57 = sphi 0, %s54
      %s58 = sphi 0, %s57
      %s74 = sphi 0, %s58
      %s78 = sphi 0, %s78
      %s80 = sphi 0, %s78
      %s81 = sphi 0, %s80
      %s95 = sphi 0, %s81
      %s99 = sphi 0, %s99
      %s101 = sphi 0, %s99
      %s102 = sphi 0, %s101
      %s116 = sphi 0, %s102
      %s120 = sphi 0, %s120
      %s122 = sphi 0, %s120
      %s123 = sphi 0, %s122
      %s137 = sphi 0, %s123
      %s141 = sphi 0, %s141
      %s143 = sphi 0, %s141
      %s144 = sphi 0, %s143
      %s158 = sphi 0, %s144
      %s164 = sphi 0, %s166
      %s167 = sphi 0, %s164
      %s168 = sphi 0, %s167
      %s184 = sphi 0, %s168
    $region4: #{tpu_custom_call.1} parent=1 // loop_header_branch
      %21 = sbr.rel (%p19) target = $region8
    $region5: #{tpu_custom_call.1} parent=1 // loop_body
      %s23 = ssub.s32 %s18, 1
      %s24 = ssub.s32 %s18, 2
      %s25 = sadd.s32 %s18, 1
      %s26 = ssub.s32 %s18, %s25
      %p27 = scmp.eq.s32.totalorder %s26, 0
      %s29 = sadd.s32 %s28, 1
      %s30 = scalar_select %p27, %s28, %s29
      %p33 = pneg %p27
      %p34 = scmp.eq.s32.totalorder %s18, 3
      %p35 = por %p33, %p34
      %p36 = scmp.ne.s32.totalorder %s28, %s31
      %p37 = scmp.eq.s32.totalorder %s18, 0
      %p38 = por %p36, %p37
      %p39 = scmp.ne.s32.totalorder %s28, %s31
      %p40 = scmp.eq.s32.totalorder %s23, 3
      %p41 = por %p39, %p40
      %p42 = scmp.ne.s32.totalorder %s31, %s32
      %p43 = scmp.eq.s32.totalorder %s23, 0
      %p44 = por %p42, %p43
      %p45 = scmp.ne.s32.totalorder %s31, %s32
      %p46 = scmp.eq.s32.totalorder %s24, 3
      %p47 = por %p45, %p46
      %p49 = scmp.ne.s32.totalorder %s32, %s48
      %p50 = scmp.eq.s32.totalorder %s24, 0
      %p51 = por %p49, %p50
      %s52 = ssub.s32 %s18, %s25
      %p53 = scmp.eq.s32.totalorder %s52, 0
      %s55 = sadd.s32 %s54, 1
      %s56 = scalar_select %p53, %s54, %s55
      %p59 = pneg %p53
      %p60 = scmp.eq.s32.totalorder %s18, 3
      %p61 = por %p59, %p60
      %p62 = scmp.ne.s32.totalorder %s54, %s57
      %p63 = scmp.eq.s32.totalorder %s18, 0
      %p64 = por %p62, %p63
      %p65 = scmp.ne.s32.totalorder %s54, %s57
      %p66 = scmp.eq.s32.totalorder %s23, 3
      %p67 = por %p65, %p66
      %p68 = scmp.ne.s32.totalorder %s57, %s58
      %p69 = scmp.eq.s32.totalorder %s23, 0
      %p70 = por %p68, %p69
      %p71 = scmp.ne.s32.totalorder %s57, %s58
      %p72 = scmp.eq.s32.totalorder %s24, 3
      %p73 = por %p71, %p72
      %p75 = scmp.ne.s32.totalorder %s58, %s74
      %p76 = scmp.eq.s32.totalorder %s24, 0
      %p77 = por %p75, %p76
      %s79 = sadd.s32 %s78, 1
      %p82 = scmp.eq.s32.totalorder %s18, 3
      %p83 = scmp.ne.s32.totalorder %s78, %s80
      %p84 = scmp.eq.s32.totalorder %s18, 0
      %p85 = por %p83, %p84
      %p86 = scmp.ne.s32.totalorder %s78, %s80
      %p87 = scmp.eq.s32.totalorder %s23, 3
      %p88 = por %p86, %p87
      %p89 = scmp.ne.s32.totalorder %s80, %s81
      %p90 = scmp.eq.s32.totalorder %s23, 0
      %p91 = por %p89, %p90
      %p92 = scmp.ne.s32.totalorder %s80, %s81
      %p93 = scmp.eq.s32.totalorder %s24, 3
      %p94 = por %p92, %p93
      %p96 = scmp.ne.s32.totalorder %s81, %s95
      %p97 = scmp.eq.s32.totalorder %s24, 0
      %p98 = por %p96, %p97
      %s100 = sadd.s32 %s99, 1
      %p103 = scmp.eq.s32.totalorder %s18, 3
      %p104 = scmp.ne.s32.totalorder %s99, %s101
      %p105 = scmp.eq.s32.totalorder %s18, 0
      %p106 = por %p104, %p105
      %p107 = scmp.ne.s32.totalorder %s99, %s101
      %p108 = scmp.eq.s32.totalorder %s23, 3
      %p109 = por %p107, %p108
      %p110 = scmp.ne.s32.totalorder %s101, %s102
      %p111 = scmp.eq.s32.totalorder %s23, 0
      %p112 = por %p110, %p111
      %p113 = scmp.ne.s32.totalorder %s101, %s102
      %p114 = scmp.eq.s32.totalorder %s24, 3
      %p115 = por %p113, %p114
      %p117 = scmp.ne.s32.totalorder %s102, %s116
      %p118 = scmp.eq.s32.totalorder %s24, 0
      %p119 = por %p117, %p118
      %s121 = sadd.s32 %s120, 1
      %p124 = scmp.eq.s32.totalorder %s18, 3
      %p125 = scmp.ne.s32.totalorder %s120, %s122
      %p126 = scmp.eq.s32.totalorder %s18, 0
      %p127 = por %p125, %p126
      %p128 = scmp.ne.s32.totalorder %s120, %s122
      %p129 = scmp.eq.s32.totalorder %s23, 3
      %p130 = por %p128, %p129
      %p131 = scmp.ne.s32.totalorder %s122, %s123
      %p132 = scmp.eq.s32.totalorder %s23, 0
      %p133 = por %p131, %p132
      %p134 = scmp.ne.s32.totalorder %s122, %s123
      %p135 = scmp.eq.s32.totalorder %s24, 3
      %p136 = por %p134, %p135
      %p138 = scmp.ne.s32.totalorder %s123, %s137
      %p139 = scmp.eq.s32.totalorder %s24, 0
      %p140 = por %p138, %p139
      %s142 = sadd.s32 %s141, 1
      %p145 = scmp.eq.s32.totalorder %s18, 3
      %p146 = scmp.ne.s32.totalorder %s141, %s143
      %p147 = scmp.eq.s32.totalorder %s18, 0
      %p148 = por %p146, %p147
      %p149 = scmp.ne.s32.totalorder %s141, %s143
      %p150 = scmp.eq.s32.totalorder %s23, 3
      %p151 = por %p149, %p150
      %p152 = scmp.ne.s32.totalorder %s143, %s144
      %p153 = scmp.eq.s32.totalorder %s23, 0
      %p154 = por %p152, %p153
      %p155 = scmp.ne.s32.totalorder %s143, %s144
      %p156 = scmp.eq.s32.totalorder %s24, 3
      %p157 = por %p155, %p156
      %p159 = scmp.ne.s32.totalorder %s144, %s158
      %p160 = scmp.eq.s32.totalorder %s24, 0
      %p161 = por %p159, %p160
      %s162 = ssub.s32 %s18, %s25
      %p163 = scmp.eq.s32.totalorder %s162, 0
      %s165 = sadd.s32 %s164, 1
      %s166 = scalar_select %p163, %s164, %s165
      %p169 = pneg %p163
      %p170 = scmp.eq.s32.totalorder %s18, 3
      %p171 = por %p169, %p170
      %p172 = scmp.ne.s32.totalorder %s164, %s167
      %p173 = scmp.eq.s32.totalorder %s18, 0
      %p174 = por %p172, %p173
      %p175 = scmp.ne.s32.totalorder %s164, %s167
      %p176 = scmp.eq.s32.totalorder %s23, 3
      %p177 = por %p175, %p176
      %p178 = scmp.ne.s32.totalorder %s167, %s168
      %p179 = scmp.eq.s32.totalorder %s23, 0
      %p180 = por %p178, %p179
      %p181 = scmp.ne.s32.totalorder %s167, %s168
      %p182 = scmp.eq.s32.totalorder %s24, 3
      %p183 = por %p181, %p182
      %p185 = scmp.ne.s32.totalorder %s168, %s184
      %p186 = scmp.eq.s32.totalorder %s24, 0
      %p187 = por %p185, %p186
      %p188 = scmp.le.s32.totalorder 1, %s18
      %p189 = scmp.lt.s32.totalorder %s18, 5
      %p190 = pnand %p188, %p189
      %p191 = pneg %p190
      // Predicated region
      $region9: #{tpu_custom_call.1} parent=5 // pred_check
        _
      $region10: #{tpu_custom_call.1} parent=5 // pred_check_branch
        %193 = sbr.rel (%p190) target = $region12
      $region11: #{tpu_custom_call.1} parent=5 // pred_region
        %s194 = ssub.s32 %s18, 1
        // Predicated region
        $region13: #{tpu_custom_call.1} parent=11 // pred_check
          %p195 = pneg %p91
        $region14: #{tpu_custom_call.1} parent=11 // pred_check_branch
          %197 = sbr.rel (%p195) target = $region16
        $region15: #{tpu_custom_call.1} parent=11 // pred_region
          _
        $region16: #{tpu_custom_call.1} parent=11 // pred_fallthru
          _
        // Predicated region
        $region17: #{tpu_custom_call.1} parent=11 // pred_check
          %p198 = pneg %p112
        $region18: #{tpu_custom_call.1} parent=11 // pred_check_branch
          %200 = sbr.rel (%p198) target = $region20
        $region19: #{tpu_custom_call.1} parent=11 // pred_region
          _
        $region20: #{tpu_custom_call.1} parent=11 // pred_fallthru
          _
        // Predicated region
        $region21: #{tpu_custom_call.1} parent=11 // pred_check
          %p201 = pneg %p133
        $region22: #{tpu_custom_call.1} parent=11 // pred_check_branch
          %203 = sbr.rel (%p201) target = $region24
        $region23: #{tpu_custom_call.1} parent=11 // pred_region
          _
        $region24: #{tpu_custom_call.1} parent=11 // pred_fallthru
          _
        // Predicated region
        $region25: #{tpu_custom_call.1} parent=11 // pred_check
          %p204 = pneg %p154
        $region26: #{tpu_custom_call.1} parent=11 // pred_check_branch
          %206 = sbr.rel (%p204) target = $region28
        $region27: #{tpu_custom_call.1} parent=11 // pred_region
          _
        $region28: #{tpu_custom_call.1} parent=11 // pred_fallthru
          _
      $region12: #{tpu_custom_call.1} parent=5 // pred_fallthru
        _
      %p207 = scmp.lt.s32.totalorder %s18, 4
      // Predicated region
      $region29: #{tpu_custom_call.1} parent=5 // pred_check
        %p208 = pneg %p207
      $region30: #{tpu_custom_call.1} parent=5 // pred_check_branch
        %210 = sbr.rel (%p208) target = $region32
      $region31: #{tpu_custom_call.1} parent=5 // pred_region
        // Predicated region
        $region33: #{tpu_custom_call.1} parent=31 // pred_check
          %p211 = pneg %p38
        $region34: #{tpu_custom_call.1} parent=31 // pred_check_branch
          %213 = sbr.rel (%p211) target = $region36
        $region35: #{tpu_custom_call.1} parent=31 // pred_region
          %s214 = sand.u32 %s28, 1
          %s215 = scalar_lea.sflag [#allocation3], %s214
          %s216 = sand.u32 %s28, 1
          %s217 = smul.addr %s216, 256
          %s218 = scalar_lea.vmem [#allocation2], %s217
          %s219 = smul.u32 16, %s18
          %s221 = ssub.s32 4096, 4096
          %222 = vsyncadd %s215, %s221
          %s223 = smul.addr %s219, 2
          %s224 = smul.addr %s223, 128
          %s225 = scalar_lea.hbm %s0, %s224
          %s226 = sshll.u32 %s218, 4
          %s227 = int_to_ptr.vmem [resolvable:$true] %s226
          %232 = dma.hbm_to_vmem [thread:$0]  %s225, 4096, %s227, %s215, 256, 256, 16
        $region36: #{tpu_custom_call.1} parent=31 // pred_fallthru
          _
        // Predicated region
        $region37: #{tpu_custom_call.1} parent=31 // pred_check
          %p233 = pneg %p64
        $region38: #{tpu_custom_call.1} parent=31 // pred_check_branch
          %235 = sbr.rel (%p233) target = $region40
        $region39: #{tpu_custom_call.1} parent=31 // pred_region
          %s236 = smul.u32 16, %s18
          %p237 = scmp.lt.s32.totalorder %s236, 63
          %s238 = scalar_select %p237, %s236, 63
          %s239 = smul.addr %s238, 8
          %s240 = scalar_lea.vmem %s1, %s239
          %s241 = smul.u32 16, %s18
        $region40: #{tpu_custom_call.1} parent=31 // pred_fallthru
          _
      $region32: #{tpu_custom_call.1} parent=5 // pred_fallthru
        _
      %p242 = scmp.le.s32.totalorder 1, %s18
      %p243 = scmp.lt.s32.totalorder %s18, 5
      %p244 = pnand %p242, %p243
      %p245 = pneg %p244
      // Predicated region
      $region41: #{tpu_custom_call.1} parent=5 // pred_check
        _
      $region42: #{tpu_custom_call.1} parent=5 // pred_check_branch
        %247 = sbr.rel (%p244) target = $region44
      $region43: #{tpu_custom_call.1} parent=5 // pred_region
        %s248 = ssub.s32 %s18, 1
        %s249 = sand.u32 %s31, 1
        %s250 = scalar_lea.sflag [#allocation3], %s249
        %s251 = sand.u32 %s31, 1
        %s252 = smul.addr %s251, 256
        %s253 = scalar_lea.vmem [#allocation2], %s252
        // Predicated region
        $region45: #{tpu_custom_call.1} parent=43 // pred_check
          %p254 = pneg %p44
        $region46: #{tpu_custom_call.1} parent=43 // pred_check_branch
          %256 = sbr.rel (%p254) target = $region48
        $region47: #{tpu_custom_call.1} parent=43 // pred_region
          %257 = dma.done %s250, 4096
        $region48: #{tpu_custom_call.1} parent=43 // pred_fallthru
          _
        %s258 = sand.u32 %s31, 1
        %s259 = scalar_lea.sflag [#allocation3], %s258
        %s260 = sand.u32 %s31, 1
        %s261 = smul.addr %s260, 256
        %s262 = scalar_lea.vmem [#allocation2], %s261
        %p263 = pneg %p44
        %p264 = pneg %p41
        %s265 = smul.u32 16, %s23
        %p266 = scmp.lt.s32.totalorder %s265, 63
        %s267 = scalar_select %p266, %s265, 63
        %s268 = smul.addr %s267, 8
        %s269 = scalar_lea.vmem %s1, %s268
        %p270 = pneg %p70
        %p271 = pneg %p67
        %p272 = pneg %p91
        %p273 = pneg %p88
        %p274 = pneg %p112
        %p275 = pneg %p109
        %p276 = pneg %p133
        %p277 = pneg %p130
        %p278 = pneg %p154
        %p279 = pneg %p151
        %p280 = pneg %p180
        %p281 = pneg %p177
        %s282 = sand.u32 %s167, 1
        %s283 = scalar_lea.sflag [#allocation4], %s282
        %s284 = sand.u32 %s167, 1
        %s285 = scalar_lea.vmem [#allocation5], %s284
        %s286 = smul.u32 16, %s23
        %s287 = smul.u32 16, %s23
        %p288 = scmp.lt.s32.totalorder %s287, 63
        %s289 = scalar_select %p288, %s287, 63
        %s290 = smul.addr %s289, 8
        %s291 = scalar_lea.vmem %s1, %s290
        %s292 = smul.u32 16, %s23
        %v293 = vld [vmem:[%s253] sm:$0xff]
        %v294 = vld [vmem:[%s253 + $0x8] sm:$0xff]
        %v295 = vld [vmem:[%s253 + $0x10] sm:$0xff]
        %v296 = vld [vmem:[%s253 + $0x18] sm:$0xff]
        %v297 = vld [vmem:[%s253 + $0x20] sm:$0xff]
        %v298 = vld [vmem:[%s253 + $0x28] sm:$0xff]
        %v299 = vld [vmem:[%s253 + $0x30] sm:$0xff]
        %v300 = vld [vmem:[%s253 + $0x38] sm:$0xff]
        %v301 = vld [vmem:[%s253 + $0x40] sm:$0xff]
        %v302 = vld [vmem:[%s253 + $0x48] sm:$0xff]
        %v303 = vld [vmem:[%s253 + $0x50] sm:$0xff]
        %v304 = vld [vmem:[%s253 + $0x58] sm:$0xff]
        %v305 = vld [vmem:[%s253 + $0x60] sm:$0xff]
        %v306 = vld [vmem:[%s253 + $0x68] sm:$0xff]
        %v307 = vld [vmem:[%s253 + $0x70] sm:$0xff]
        %v308 = vld [vmem:[%s253 + $0x78] sm:$0xff]
        %v309 = vld [vmem:[%s253 + $0x80] sm:$0xff]
        %v310 = vld [vmem:[%s253 + $0x88] sm:$0xff]
        %v311 = vld [vmem:[%s253 + $0x90] sm:$0xff]
        %v312 = vld [vmem:[%s253 + $0x98] sm:$0xff]
        %v313 = vld [vmem:[%s253 + $0xa0] sm:$0xff]
        %v314 = vld [vmem:[%s253 + $0xa8] sm:$0xff]
        %v315 = vld [vmem:[%s253 + $0xb0] sm:$0xff]
        %v316 = vld [vmem:[%s253 + $0xb8] sm:$0xff]
        %v317 = vld [vmem:[%s253 + $0xc0] sm:$0xff]
        %v318 = vld [vmem:[%s253 + $0xc8] sm:$0xff]
        %v319 = vld [vmem:[%s253 + $0xd0] sm:$0xff]
        %v320 = vld [vmem:[%s253 + $0xd8] sm:$0xff]
        %v321 = vld [vmem:[%s253 + $0xe0] sm:$0xff]
        %v322 = vld [vmem:[%s253 + $0xe8] sm:$0xff]
        %v323 = vld [vmem:[%s253 + $0xf0] sm:$0xff]
        %v324 = vld [vmem:[%s253 + $0xf8] sm:$0xff]
        %v325 = vld [vmem:[%s2] sm:$0xff]
        %v326 = vld [vmem:[%s2 + $0x8] sm:$0xff]
        %v327 = vld [vmem:[%s2 + $0x10] sm:$0xff]
        %v328 = vld [vmem:[%s2 + $0x18] sm:$0xff]
        %v329 = vld [vmem:[%s2 + $0x20] sm:$0xff]
        %v330 = vld [vmem:[%s2 + $0x28] sm:$0xff]
        %v331 = vld [vmem:[%s2 + $0x30] sm:$0xff]
        %v332 = vld [vmem:[%s2 + $0x38] sm:$0xff]
        %v333 = vld [vmem:[%s2 + $0x40] sm:$0xff]
        %v334 = vld [vmem:[%s2 + $0x48] sm:$0xff]
        %v335 = vld [vmem:[%s2 + $0x50] sm:$0xff]
        %v336 = vld [vmem:[%s2 + $0x58] sm:$0xff]
        %v337 = vld [vmem:[%s2 + $0x60] sm:$0xff]
        %v338 = vld [vmem:[%s2 + $0x68] sm:$0xff]
        %v339 = vld [vmem:[%s2 + $0x70] sm:$0xff]
        %v340 = vld [vmem:[%s2 + $0x78] sm:$0xff]
        %v341 = vld [vmem:[%s2 + $0x80] sm:$0xff]
        %v342 = vld [vmem:[%s2 + $0x88] sm:$0xff]
        %v343 = vld [vmem:[%s2 + $0x90] sm:$0xff]
        %v344 = vld [vmem:[%s2 + $0x98] sm:$0xff]
        %v345 = vld [vmem:[%s2 + $0xa0] sm:$0xff]
        %v346 = vld [vmem:[%s2 + $0xa8] sm:$0xff]
        %v347 = vld [vmem:[%s2 + $0xb0] sm:$0xff]
        %v348 = vld [vmem:[%s2 + $0xb8] sm:$0xff]
        %v349 = vld [vmem:[%s2 + $0xc0] sm:$0xff]
        %v350 = vld [vmem:[%s2 + $0xc8] sm:$0xff]
        %v351 = vld [vmem:[%s2 + $0xd0] sm:$0xff]
        %v352 = vld [vmem:[%s2 + $0xd8] sm:$0xff]
        %v353 = vld [vmem:[%s2 + $0xe0] sm:$0xff]
        %v354 = vld [vmem:[%s2 + $0xe8] sm:$0xff]
        %v355 = vld [vmem:[%s2 + $0xf0] sm:$0xff]
        %v356 = vld [vmem:[%s2 + $0xf8] sm:$0xff]
        %357 = vmatprep.subr.mxu0 0.0
        %358 = vmatpush1.msra.mxu0 %v325
        %359 = vmatprep.subr.mxu0 0.0
        %360 = vmatpush1.msra.mxu0 %v326
        %361 = vmatprep.subr.mxu0 0.0
        %362 = vmatpush1.msra.mxu0 %v327
        %363 = vmatprep.subr.mxu0 0.0
        %364 = vmatpush1.msra.mxu0 %v328
        %365 = vmatprep.subr.mxu0 0.0
        %366 = vmatpush1.msra.mxu0 %v329
        %367 = vmatprep.subr.mxu0 0.0
        %368 = vmatpush1.msra.mxu0 %v330
        %369 = vmatprep.subr.mxu0 0.0
        %370 = vmatpush1.msra.mxu0 %v331
        %371 = vmatprep.subr.mxu0 0.0
        %372 = vmatpush1.msra.mxu0 %v332
        %373 = vmatprep.subr.mxu0 0.0
        %374 = vmatpush1.msra.mxu0 %v333
        %375 = vmatprep.subr.mxu0 0.0
        %376 = vmatpush1.msra.mxu0 %v334
        %377 = vmatprep.subr.mxu0 0.0
        %378 = vmatpush1.msra.mxu0 %v335
        %379 = vmatprep.subr.mxu0 0.0
        %380 = vmatpush1.msra.mxu0 %v336
        %381 = vmatprep.subr.mxu0 0.0
        %382 = vmatpush1.msra.mxu0 %v337
        %383 = vmatprep.subr.mxu0 0.0
        %384 = vmatpush1.msra.mxu0 %v338
        %385 = vmatprep.subr.mxu0 0.0
        %386 = vmatpush1.msra.mxu0 %v339
        %387 = vmatprep.subr.mxu0 0.0
        %388 = vmatpush1.msra.mxu0 %v340
        %389 = vmatprep.subr.mxu0 0.0
        %390 = vmatpush1.msra.mxu0 %v341
        %391 = vmatprep.subr.mxu0 0.0
        %392 = vmatpush1.msra.mxu0 %v342
        %393 = vmatprep.subr.mxu0 0.0
        %394 = vmatpush1.msra.mxu0 %v343
        %395 = vmatprep.subr.mxu0 0.0
        %396 = vmatpush1.msra.mxu0 %v344
        %397 = vmatprep.subr.mxu0 0.0
        %398 = vmatpush1.msra.mxu0 %v345
        %399 = vmatprep.subr.mxu0 0.0
        %400 = vmatpush1.msra.mxu0 %v346
        %401 = vmatprep.subr.mxu0 0.0
        %402 = vmatpush1.msra.mxu0 %v347
        %403 = vmatprep.subr.mxu0 0.0
        %404 = vmatpush1.msra.mxu0 %v348
        %405 = vmatprep.subr.mxu0 0.0
        %406 = vmatpush1.msra.mxu0 %v349
        %407 = vmatprep.subr.mxu0 0.0
        %408 = vmatpush1.msra.mxu0 %v350
        %409 = vmatprep.subr.mxu0 0.0
        %410 = vmatpush1.msra.mxu0 %v351
        %411 = vmatprep.subr.mxu0 0.0
        %412 = vmatpush1.msra.mxu0 %v352
        %413 = vmatprep.subr.mxu0 0.0
        %414 = vmatpush1.msra.mxu0 %v353
        %415 = vmatprep.subr.mxu0 0.0
        %416 = vmatpush1.msra.mxu0 %v354
        %417 = vmatprep.subr.mxu0 0.0
        %418 = vmatpush1.msra.mxu0 %v355
        %419 = vmatprep.subr.mxu0 0.0
        %420 = vmatpush1.msra.mxu0 %v356
        %421 = vmatprep.mubr.f32.mxu0 %v294
        %422 = vmatmul.mubr.f32.gmra.mrb[0].mxu0 %v293
        %v423 = vpop.f32.mrb[0].mxu0
        %v424 = vadd.f32 0.0, %v423
        %v425 = vpop.f32.mrb[0].mxu0
        %426 = vmatprep.mubr.f32.mxu0 %v296
        %427 = vmatmul.mubr.f32.gmra.mrb[0].mxu0 %v295
        %v428 = vpop.f32.mrb[0].mxu0
        %v429 = vadd.f32 0.0, %v428
        %v430 = vpop.f32.mrb[0].mxu0
        %431 = vmatprep.mubr.f32.mxu0 %v298
        %432 = vmatmul.mubr.f32.gmra.mrb[0].mxu0 %v297
        %v433 = vpop.f32.mrb[0].mxu0
        %v434 = vadd.f32 0.0, %v433
        %v435 = vpop.f32.mrb[0].mxu0
        %436 = vmatprep.mubr.f32.mxu0 %v300
        %437 = vmatmul.mubr.f32.gmra.mrb[0].mxu0 %v299
        %v438 = vpop.f32.mrb[0].mxu0
        %v439 = vadd.f32 0.0, %v438
        %v440 = vpop.f32.mrb[0].mxu0
        %441 = vmatprep.mubr.f32.mxu0 %v302
        %442 = vmatmul.mubr.f32.gmra.mrb[0].mxu0 %v301
        %v443 = vpop.f32.mrb[0].mxu0
        %v444 = vadd.f32 0.0, %v443
        %v445 = vpop.f32.mrb[0].mxu0
        %446 = vmatprep.mubr.f32.mxu0 %v304
        %447 = vmatmul.mubr.f32.gmra.mrb[0].mxu0 %v303
        %v448 = vpop.f32.mrb[0].mxu0
        %v449 = vadd.f32 0.0, %v448
        %v450 = vpop.f32.mrb[0].mxu0
        %451 = vmatprep.mubr.f32.mxu0 %v306
        %452 = vmatmul.mubr.f32.gmra.mrb[0].mxu0 %v305
        %v453 = vpop.f32.mrb[0].mxu0
        %v454 = vadd.f32 0.0, %v453
        %v455 = vpop.f32.mrb[0].mxu0
        %456 = vmatprep.mubr.f32.mxu0 %v308
        %457 = vmatmul.mubr.f32.gmra.mrb[0].mxu0 %v307
        %v458 = vpop.f32.mrb[0].mxu0
        %v459 = vadd.f32 0.0, %v458
        %v460 = vpop.f32.mrb[0].mxu0
        %461 = vmatprep.mubr.f32.mxu0 %v310
        %462 = vmatmul.mubr.f32.gmra.mrb[0].mxu0 %v309
        %v463 = vpop.f32.mrb[0].mxu0
        %v464 = vadd.f32 0.0, %v463
        %v465 = vpop.f32.mrb[0].mxu0
        %466 = vmatprep.mubr.f32.mxu0 %v312
        %467 = vmatmul.mubr.f32.gmra.mrb[0].mxu0 %v311
        %v468 = vpop.f32.mrb[0].mxu0
        %v469 = vadd.f32 0.0, %v468
        %v470 = vpop.f32.mrb[0].mxu0
        %471 = vmatprep.mubr.f32.mxu0 %v314
        %472 = vmatmul.mubr.f32.gmra.mrb[0].mxu0 %v313
        %v473 = vpop.f32.mrb[0].mxu0
        %v474 = vadd.f32 0.0, %v473
        %v475 = vpop.f32.mrb[0].mxu0
        %476 = vmatprep.mubr.f32.mxu0 %v316
        %477 = vmatmul.mubr.f32.gmra.mrb[0].mxu0 %v315
        %v478 = vpop.f32.mrb[0].mxu0
        %v479 = vadd.f32 0.0, %v478
        %v480 = vpop.f32.mrb[0].mxu0
        %481 = vmatprep.mubr.f32.mxu0 %v318
        %482 = vmatmul.mubr.f32.gmra.mrb[0].mxu0 %v317
        %v483 = vpop.f32.mrb[0].mxu0
        %v484 = vadd.f32 0.0, %v483
        %v485 = vpop.f32.mrb[0].mxu0
        %486 = vmatprep.mubr.f32.mxu0 %v320
        %487 = vmatmul.mubr.f32.gmra.mrb[0].mxu0 %v319
        %v488 = vpop.f32.mrb[0].mxu0
        %v489 = vadd.f32 0.0, %v488
        %v490 = vpop.f32.mrb[0].mxu0
        %491 = vmatprep.mubr.f32.mxu0 %v322
        %492 = vmatmul.mubr.f32.gmra.mrb[0].mxu0 %v321
        %v493 = vpop.f32.mrb[0].mxu0
        %v494 = vadd.f32 0.0, %v493
        %v495 = vpop.f32.mrb[0].mxu0
        %496 = vmatprep.mubr.f32.mxu0 %v324
        %497 = vmatmul.mubr.f32.gmra.mrb[0].mxu0 %v323
        %v498 = vpop.f32.mrb[0].mxu0
        %v499 = vadd.f32 0.0, %v498
        %v500 = vpop.f32.mrb[0].mxu0
        %501 = vdwg.mxu0
        %v502 = vld [vmem:[%s291] sm:$0xff]
        %v503 = vld [vmem:[%s291 + $0x8] sm:$0xff]
        %v504 = vld [vmem:[%s291 + $0x10] sm:$0xff]
        %v505 = vld [vmem:[%s291 + $0x18] sm:$0xff]
        %v506 = vld [vmem:[%s291 + $0x20] sm:$0xff]
        %v507 = vld [vmem:[%s291 + $0x28] sm:$0xff]
        %v508 = vld [vmem:[%s291 + $0x30] sm:$0xff]
        %v509 = vld [vmem:[%s291 + $0x38] sm:$0xff]
        %v510 = vld [vmem:[%s291 + $0x40] sm:$0xff]
        %v511 = vld [vmem:[%s291 + $0x48] sm:$0xff]
        %v512 = vld [vmem:[%s291 + $0x50] sm:$0xff]
        %v513 = vld [vmem:[%s291 + $0x58] sm:$0xff]
        %v514 = vld [vmem:[%s291 + $0x60] sm:$0xff]
        %v515 = vld [vmem:[%s291 + $0x68] sm:$0xff]
        %v516 = vld [vmem:[%s291 + $0x70] sm:$0xff]
        %v517 = vld [vmem:[%s291 + $0x78] sm:$0xff]
        %v518 = vsub.f32 %v424, %v502
        %v519 = vsub.f32 %v429, %v503
        %v520 = vsub.f32 %v434, %v504
        %v521 = vsub.f32 %v439, %v505
        %v522 = vsub.f32 %v444, %v506
        %v523 = vsub.f32 %v449, %v507
        %v524 = vsub.f32 %v454, %v508
        %v525 = vsub.f32 %v459, %v509
        %v526 = vsub.f32 %v464, %v510
        %v527 = vsub.f32 %v469, %v511
        %v528 = vsub.f32 %v474, %v512
        %v529 = vsub.f32 %v479, %v513
        %v530 = vsub.f32 %v484, %v514
        %v531 = vsub.f32 %v489, %v515
        %v532 = vsub.f32 %v494, %v516
        %v533 = vsub.f32 %v499, %v517
        %v534 = vmul.f32 %v518, %v518
        %v535 = vmul.f32 %v519, %v519
        %v536 = vmul.f32 %v520, %v520
        %v537 = vmul.f32 %v521, %v521
        %v538 = vmul.f32 %v522, %v522
        %v539 = vmul.f32 %v523, %v523
        %v540 = vmul.f32 %v524, %v524
        %v541 = vmul.f32 %v525, %v525
        %v542 = vmul.f32 %v526, %v526
        %v543 = vmul.f32 %v527, %v527
        %v544 = vmul.f32 %v528, %v528
        %v545 = vmul.f32 %v529, %v529
        %v546 = vmul.f32 %v530, %v530
        %v547 = vmul.f32 %v531, %v531
        %v548 = vmul.f32 %v532, %v532
        %v549 = vmul.f32 %v533, %v533
        %vm550 = vcmask 7168
        %v551 = vsel %vm550, %v534, 0.0
        %v552 = vsel %vm550, %v535, 0.0
        %v553 = vadd.f32 %v551, %v552
        %v554 = vsel %vm550, %v536, 0.0
        %v555 = vadd.f32 %v553, %v554
        %v556 = vsel %vm550, %v537, 0.0
        %v557 = vadd.f32 %v555, %v556
        %v558 = vsel %vm550, %v538, 0.0
        %v559 = vadd.f32 %v557, %v558
        %v560 = vsel %vm550, %v539, 0.0
        %v561 = vadd.f32 %v559, %v560
        %v562 = vsel %vm550, %v540, 0.0
        %v563 = vadd.f32 %v561, %v562
        %v564 = vsel %vm550, %v541, 0.0
        %v565 = vadd.f32 %v563, %v564
        %v566 = vsel %vm550, %v542, 0.0
        %v567 = vadd.f32 %v565, %v566
        %v568 = vsel %vm550, %v543, 0.0
        %v569 = vadd.f32 %v567, %v568
        %v570 = vsel %vm550, %v544, 0.0
        %v571 = vadd.f32 %v569, %v570
        %v572 = vsel %vm550, %v545, 0.0
        %v573 = vadd.f32 %v571, %v572
        %v574 = vsel %vm550, %v546, 0.0
        %v575 = vadd.f32 %v573, %v574
        %v576 = vsel %vm550, %v547, 0.0
        %v577 = vadd.f32 %v575, %v576
        %v578 = vsel %vm550, %v548, 0.0
        %v579 = vadd.f32 %v577, %v578
        %v580 = vsel %vm550, %v549, 0.0
        %v581 = vadd.f32 %v579, %v580
        %582 = vadd.xlane.f32.xlu0 %v581
        %v583 = vpop.xlane.xlu0 %582
        %v584 = vrot.slane %v583, 4
        %v585 = vadd.f32 %v583, %v584
        %v586 = vrot.slane %v585, 2
        %v587 = vadd.f32 %v585, %v586
        %v588 = vrot.slane %v587, 1
        %v589 = vadd.f32 %v587, %v588
        %s590 = vtos %v589
        %v591 = vlaneseq
        %v592 = vand.u32 %v591, 127
        %vm593 = vcmp.eq.s32.totalorder %v592, 0
        %v594 = vstv %s590
        %v595 = vsel %vm593, %v594, 0.0
        %596 = vst [vmem:[%s285] sm:$0x1] %v595
        %p597 = scmp.eq.s32.totalorder %s23, 0
        // Predicated region
        $region49: #{tpu_custom_call.1} parent=43 // pred_check
          %p598 = pneg %p597
        $region50: #{tpu_custom_call.1} parent=43 // pred_check_branch
          %600 = sbr.rel (%p598) target = $region52
        $region51: #{tpu_custom_call.1} parent=43 // pred_region
          %v601 = vld [vmem:[%s3] sm:$0x3]
          %v602 = vld [vmem:[%s5] sm:$0x3]
          %v603 = vsub.f32 %v601, %v602
          %v604 = vld [vmem:[%s4] sm:$0x3]
          %v605 = vmul.f32 %v603, %v604
          %v606 = vmul.f32 %v605, %v603
          %v608 = vlaneseq
          %v609 = vshrl.u32 %v608, 7
          %v610 = vsub.s32 0, %v609
          %v611 = vrot.slane %v606, %v610
          %v612 = vlaneseq
          %v613 = vshrl.u32 %v612, 7
          %v614 = vsub.s32 1, %v613
          %v615 = vrot.slane %v606, %v614
          %vm618 = vcmask 1040384
          %v619 = vsel %vm618, %v611, 0.0
          %v620 = vsel %vm618, %v615, 0.0
          %v621 = vadd.f32 %v619, %v620
          %622 = vadd.xlane.f32.xlu0 %v621
          %v623 = vpop.xlane.xlu0 %622
          %v624 = vrot.slane %v623, 4
          %v625 = vadd.f32 %v623, %v624
          %v626 = vrot.slane %v625, 2
          %v627 = vadd.f32 %v625, %v626
          %v628 = vrot.slane %v627, 1
          %v629 = vadd.f32 %v627, %v628
          %s630 = vtos %v629
          %s631 = sadd.f32 %s590, %s630
          %v632 = vstv %s631
          %v633 = vsel %vm593, %v632, 0.0
          %634 = vst [vmem:[%s285] sm:$0x1] %v633
        $region52: #{tpu_custom_call.1} parent=43 // pred_fallthru
          _
        %s635 = sand.u32 %s167, 1
        %s636 = scalar_lea.sflag [#allocation4], %s635
        %s637 = sand.u32 %s167, 1
        %s638 = scalar_lea.vmem [#allocation5], %s637
        // Predicated region
        $region53: #{tpu_custom_call.1} parent=43 // pred_check
          %p639 = pneg %p177
        $region54: #{tpu_custom_call.1} parent=43 // pred_check_branch
          %641 = sbr.rel (%p639) target = $region56
        $region55: #{tpu_custom_call.1} parent=43 // pred_region
          %s643 = ssub.s32 16, 16
          %644 = vsyncadd %s636, %s643
          %s645 = smul.addr %s23, 16
          %s646 = scalar_lea.hbm %s6, %s645
          %s648 = sshll.u32 %s638, 4
          %s649 = int_to_ptr.vmem [resolvable:$true] %s648
          %651 = dma.vmem_to_hbm [thread:$0]  %s649, 16, %s646, %s636
        $region56: #{tpu_custom_call.1} parent=43 // pred_fallthru
          _
      $region44: #{tpu_custom_call.1} parent=5 // pred_fallthru
        _
      %p652 = scmp.le.s32.totalorder 2, %s18
      // Predicated region
      $region57: #{tpu_custom_call.1} parent=5 // pred_check
        %p653 = pneg %p652
      $region58: #{tpu_custom_call.1} parent=5 // pred_check_branch
        %655 = sbr.rel (%p653) target = $region60
      $region59: #{tpu_custom_call.1} parent=5 // pred_region
        %s656 = ssub.s32 %s18, 2
        // Predicated region
        $region61: #{tpu_custom_call.1} parent=59 // pred_check
          %p657 = pneg %p183
        $region62: #{tpu_custom_call.1} parent=59 // pred_check_branch
          %659 = sbr.rel (%p657) target = $region64
        $region63: #{tpu_custom_call.1} parent=59 // pred_region
          %s660 = sand.u32 %s168, 1
          %s661 = scalar_lea.sflag [#allocation4], %s660
          %s662 = sand.u32 %s168, 1
          %s663 = scalar_lea.vmem [#allocation5], %s662
          %664 = dma.done %s661, 16
        $region64: #{tpu_custom_call.1} parent=59 // pred_fallthru
          _
      $region60: #{tpu_custom_call.1} parent=5 // pred_fallthru
        _
    $region6: #{tpu_custom_call.1} parent=1 // loop_footer
      %s22 = sadd.s32 1, %s18
    $region7: #{tpu_custom_call.1} parent=1 // loop_footer_branch
      %17 = sbr.rel target = $region3
    $region8: #{tpu_custom_call.1} parent=1 // loop_exit
      _
    %665 = vsyncpa [#allocation3], 1
    %s666 = scalar_lea.sflag [#allocation3], 1
    %667 = vsyncpa %s666, 1
    %668 = vsyncpa [#allocation4], 1
    %s669 = scalar_lea.sflag [#allocation4], 1
    %670 = vsyncpa %s669, 1

</llo_original>
